<compile_context>
chip_gen: v7x
topology: tpu7x:2x2x1
jax: 0.10.0
libtpu: 0.0.40
codegen_flags: <defaults>
</compile_context>

<pallas_src>
import functools

import jax
import jax.numpy as jnp
from jax.experimental import pallas as pl
from jax.experimental.pallas import tpu as pltpu


_LANE = 128
_SUBLANE = 8


def _round_up(x: int, m: int) -> int:
    return ((x + m - 1) // m) * m


def _cdiv(a: int, b: int) -> int:
    return -(-a // b)


def _sublane_pack(dtype) -> int:
    """Sublane packing of the input dtype: 8 for f32, 16 for bf16, 32 for int8."""
    return max(_SUBLANE, 32 // jnp.dtype(dtype).itemsize)


def _tpu_info():
    """(num_tensorcores, per-core VMEM bytes), with safe fallbacks."""
    kind = ""
    try:
        kind = jax.devices()[0].device_kind.lower()
    except Exception:
        pass
    is_v7 = "v7" in kind
    try:
        vmem = int(pltpu.get_tpu_info().vmem_capacity_bytes)
    except Exception:
        vmem = (64 << 20) if is_v7 else (128 << 20)
    if is_v7:
        # get_tpu_info may report per-chip capacity; clamp to per-TensorCore.
        vmem = min(vmem, 64 << 20)
    num_cores = 2 if is_v7 else 1
    return num_cores, vmem


# --------------------------------------------------------------------------
# Single-pass kernel: full T resident per feature slab (stable centered sums).
# Ragged feature tiles need no masking: every column is independent, so any
# garbage in out-of-bounds lanes stays in those lanes and is dropped by the
# masked edge store.
# --------------------------------------------------------------------------
def _cmvn_kernel(x_ref, o_ref, *, eps: float, inv_nm1: float):
    x = x_ref[...].astype(jnp.float32)                       # (T, tf)
    mean = jnp.mean(x, axis=0, keepdims=True)                # (1, tf)
    centered = x - mean
    var = jnp.sum(centered * centered, axis=0, keepdims=True) * jnp.float32(inv_nm1)
    inv = 1.0 / (eps + jnp.sqrt(var))                        # one exact divide per row
    o_ref[...] = (centered * inv).astype(o_ref.dtype)


# --------------------------------------------------------------------------
# Two-pass kernels (long-T fallback): shifted-stats accumulation, then apply.
# --------------------------------------------------------------------------
def _cmvn_stats_kernel(x_ref, shift_ref, sum_ref, sq_ref, sum_acc, sq_acc,
                       *, total_rows: int):
    s = pl.program_id(0)
    ti = pl.program_id(2)
    nt = pl.num_programs(2)

    x = x_ref[...].astype(jnp.float32)                       # (tt, tf)
    tt = x.shape[0]

    @pl.when(ti == 0)
    def _():
        # Shift = the split's first frame (always a valid row by construction):
        # accumulating (x - shift) avoids E[x^2]-E[x]^2 cancellation.
        shift_ref[...] = x[0:1, :]
        sum_acc[...] = jnp.zeros_like(sum_acc)
        sq_acc[...] = jnp.zeros_like(sq_acc)

    # Mask frames past the end of the utterance (ragged last T tile and the
    # duplicated/clamped tail tile of a core-split).  jnp.where keeps any
    # garbage (possibly NaN/Inf) in out-of-range rows from contaminating sums.
    row0 = (s * nt + ti) * tt
    rows = row0 + jax.lax.broadcasted_iota(jnp.int32, x.shape, 0)
    xs = jnp.where(rows < total_rows, x - shift_ref[...], 0.0)

    # Sublane-resident (8, tf) accumulators: only the finalize step pays the
    # cross-sublane (XLU) reduction; the per-tile work stays on the VPU.
    g = xs.reshape(tt // _SUBLANE, _SUBLANE, xs.shape[-1])
    sum_acc[...] += jnp.sum(g, axis=0)
    sq_acc[...] += jnp.sum(g * g, axis=0)

    @pl.when(ti == nt - 1)
    def _():
        sum_ref[...] = jnp.sum(sum_acc[...], axis=0, keepdims=True)
        sq_ref[...] = jnp.sum(sq_acc[...], axis=0, keepdims=True)


def _cmvn_apply_kernel(x_ref, mean_ref, inv_ref, o_ref):
    xf = x_ref[...].astype(jnp.float32)
    o_ref[...] = ((xf - mean_ref[...]) * inv_ref[...]).astype(o_ref.dtype)


# --------------------------------------------------------------------------
# Wrappers
# --------------------------------------------------------------------------
def _cmvn_single_pass(x, T, F, eps, inv_nm1, block_budget, vmem_limit, in_bytes):
    f_lane = _round_up(F, _LANE)
    bytes_el_db = 4 * in_bytes + 2 * 4        # double-buffered in+out + f32 temps

    if F <= _LANE:
        # Single feature tile: block width == full F (legal for any F).  With a
        # one-step grid there is nothing to prefetch, so drop to a single
        # buffer when the double-buffered slab would not fit the budget.
        tf, num_f = F, 1
        nbuf = 1 if T * f_lane * bytes_el_db > block_budget else 2
    else:
        nbuf = 2
        tf_cap = max(_LANE, (block_budget // (T * bytes_el_db)) // _LANE * _LANE)
        # Keep >= 4 pipelined grid steps when the feature axis allows it so the
        # BlockSpec pipeline can overlap input DMA / compute / writeback.
        tf_target = max(_LANE, _round_up(_cdiv(f_lane, 4), _LANE))
        tf = min(tf_cap, tf_target)
        num_f = _cdiv(F, tf)                  # ragged last tile handled in-kernel

    if nbuf == 1:
        def mk_spec(shape):
            return pl.BlockSpec(shape, lambda j: (0, j),
                                pipeline_mode=pl.Buffered(1))
    else:
        def mk_spec(shape):
            return pl.BlockSpec(shape, lambda j: (0, j))

    cost = pl.CostEstimate(flops=5 * T * F, transcendentals=F,
                           bytes_accessed=2 * T * F * in_bytes)

    return pl.pallas_call(
        functools.partial(_cmvn_kernel, eps=eps, inv_nm1=inv_nm1),
        out_shape=jax.ShapeDtypeStruct((T, F), x.dtype),
        grid_spec=pltpu.PrefetchScalarGridSpec(
            num_scalar_prefetch=0,
            grid=(num_f,),
            in_specs=[mk_spec((T, tf))],
            out_specs=mk_spec((T, tf)),
        ),
        compiler_params=pltpu.CompilerParams(
            dimension_semantics=("parallel",),
            vmem_limit_bytes=vmem_limit,
        ),
        cost_estimate=cost,
    )(x)


def _cmvn_two_pass(x, T, F, eps, inv_nm1, block_budget, vmem_limit,
                   num_cores, in_bytes, t_tile):
    f_lane = _round_up(F, _LANE)
    sub = _sublane_pack(x.dtype)

    # Feature tile: full width when F <= 128, else a lane-dense multiple of 128
    # (ragged last tile handled in-kernel; no padded HBM traffic).
    tf = F if F <= _LANE else min(512, f_lane)
    num_f = _cdiv(F, tf)

    # T tile: fill the VMEM budget (dominated by pass 2's double-buffered in
    # and out blocks plus f32 temps), rounded to the dtype's sublane packing.
    per_elem = 4 * in_bytes + 3 * 4
    if t_tile is None:
        tt = (block_budget // (max(tf, _LANE) * per_elem)) // sub * sub
        tt = max(sub, min(tt, 2048))
    else:
        tt = max(sub, _round_up(int(t_tile), sub))
    tt = min(tt, _round_up(T, sub))

    num_t_total = _cdiv(T, tt)
    # v7x: with a single feature tile the "parallel" F axis cannot shard across
    # the two TensorCores, so split the T reduction instead and combine the two
    # partial statistics with Chan's parallel-variance formula below.
    n_split = 2 if (num_cores >= 2 and num_f == 1 and num_t_total >= 2) else 1
    num_t = _cdiv(num_t_total, n_split)
    last_blk = num_t_total - 1

    # Clamp the T block index so the duplicated tail iteration of a split never
    # points past the array; its rows are fully masked in-kernel anyway.
    def x_map1(s, fi, ti):
        return (jnp.minimum(s * num_t + ti, last_blk), fi)

    def stat_map(s, fi, ti):
        return (s, 0, fi)

    cost1 = pl.CostEstimate(flops=4 * T * F, transcendentals=0,
                            bytes_accessed=T * F * in_bytes + 3 * n_split * F * 4)

    shift_o, sum_o, sq_o = pl.pallas_call(
        functools.partial(_cmvn_stats_kernel, total_rows=T),
        out_shape=(jax.ShapeDtypeStruct((n_split, 1, F), jnp.float32),) * 3,
        grid_spec=pltpu.PrefetchScalarGridSpec(
            num_scalar_prefetch=0,
            grid=(n_split, num_f, num_t),
            in_specs=[pl.BlockSpec((tt, tf), x_map1)],
            out_specs=(pl.BlockSpec((None, 1, tf), stat_map),) * 3,
            scratch_shapes=[pltpu.VMEM((_SUBLANE, tf), jnp.float32),
                            pltpu.VMEM((_SUBLANE, tf), jnp.float32)],
        ),
        compiler_params=pltpu.CompilerParams(
            dimension_semantics=("parallel", "parallel", "arbitrary"),
            vmem_limit_bytes=vmem_limit,
        ),
        cost_estimate=cost1,
    )(x)

    # ---- Combine per-split shifted moments (tiny (1, F)-sized JAX ops). ----
    rows = [min(num_t * tt, T - s * num_t * tt) for s in range(n_split)]
    shift = shift_o[:, 0, :]                                  # (n_split, F)
    ssum = sum_o[:, 0, :]
    ssq = sq_o[:, 0, :]
    cnt = jnp.asarray(rows, jnp.float32)[:, None]
    mean_s = shift + ssum / cnt                               # per-split mean
    m2_s = ssq - ssum * ssum / cnt                            # per-split M2
    if n_split == 1:
        mean_row, m2 = mean_s, m2_s
    else:
        n0, n1 = float(rows[0]), float(rows[1])
        n01 = n0 + n1
        delta = mean_s[1:2] - mean_s[0:1]
        mean_row = mean_s[0:1] + delta * (n1 / n01)
        m2 = m2_s[0:1] + m2_s[1:2] + delta * delta * (n0 * n1 / n01)
    var = jnp.maximum(m2 * jnp.float32(inv_nm1), 0.0)         # NaN (T==1) propagates
    inv_row = 1.0 / (jnp.float32(eps) + jnp.sqrt(var))        # (1, F) f32
    mean_row = mean_row.astype(jnp.float32)

    # ---- Pass 2: apply (x - mean) * inv, fully parallel over both axes. ----
    cost2 = pl.CostEstimate(flops=2 * T * F, transcendentals=0,
                            bytes_accessed=2 * T * F * in_bytes + 2 * F * 4)

    return pl.pallas_call(
        _cmvn_apply_kernel,
        out_shape=jax.ShapeDtypeStruct((T, F), x.dtype),
        grid_spec=pltpu.PrefetchScalarGridSpec(
            num_scalar_prefetch=0,
            grid=(num_t_total, num_f),
            in_specs=[pl.BlockSpec((tt, tf), lambda ti, fi: (ti, fi)),
                      pl.BlockSpec((1, tf), lambda ti, fi: (0, fi)),
                      pl.BlockSpec((1, tf), lambda ti, fi: (0, fi))],
            out_specs=pl.BlockSpec((tt, tf), lambda ti, fi: (ti, fi)),
        ),
        compiler_params=pltpu.CompilerParams(
            dimension_semantics=("parallel", "parallel"),
            vmem_limit_bytes=vmem_limit,
        ),
        cost_estimate=cost2,
    )(x, mean_row, inv_row)


def cmvn(x: jax.Array, eps: float = 1e-10, *, two_pass=None, t_tile=None) -> jax.Array:
    """Normalize features over the frame (first) axis, like CMVN.forward."""
    if x.ndim != 2:
        raise ValueError(f"CMVN expects a (frames, features) tensor, got {x.shape}")
    T, F = x.shape
    in_bytes = jnp.dtype(x.dtype).itemsize
    # T == 1: torch.std(unbiased) divides by zero -> NaN; reproduce that.
    inv_nm1 = (1.0 / (T - 1)) if T > 1 else float("nan")

    num_cores, vmem_cap = _tpu_info()
    block_budget = max(8 << 20, min(vmem_cap - (16 << 20), 48 << 20))
    vmem_limit = int(min(vmem_cap - (4 << 20), block_budget + (16 << 20)))

    f_lane = _round_up(F, _LANE)
    bytes_el_sb = 2 * in_bytes + 2 * 4        # single-buffered in+out + f32 temps
    bytes_el_db = 4 * in_bytes + 2 * 4        # double-buffered in+out + f32 temps

    if two_pass is None:
        if F <= _LANE:
            # One feature tile; Buffered(1) fallback lets the slab be single-
            # buffered, so only flip to the 1.5x-traffic two-pass path when even
            # that does not fit.
            two_pass = T * f_lane * bytes_el_sb > block_budget
        else:
            # Need at least a double-buffered 128-wide slab for a useful pipeline.
            two_pass = T * _LANE * bytes_el_db > block_budget

    if not two_pass:
        return _cmvn_single_pass(x, T, F, eps, inv_nm1, block_budget,
                                 vmem_limit, in_bytes)
    return _cmvn_two_pass(x, T, F, eps, inv_nm1, block_budget, vmem_limit,
                          num_cores, in_bytes, t_tile)


def cmvn_ref(x: jax.Array, eps: float = 1e-10) -> jax.Array:
    mean = jnp.mean(x, axis=0, keepdims=True)
    std = jnp.std(x, axis=0, keepdims=True, ddof=1)   # unbiased, like torch.std
    return (x - mean) / (eps + std)


if __name__ == "__main__":
    key = jax.random.PRNGKey(0)
    k1, k2, k3, k4 = jax.random.split(key, 4)

    # (a) Mel-like features: F=80 < 128 -> single full-width block; no pad/slice.
    T1, F1 = 16, 80
    x1 = jax.random.normal(k1, (T1, F1), dtype=jnp.float32) * 3.0 + 1.5
    out1 = jax.block_until_ready(cmvn(x1))
    ref1 = cmvn_ref(x1)
    assert out1.shape == x1.shape and out1.dtype == x1.dtype
    assert jnp.allclose(out1, ref1, atol=1e-5, rtol=1e-5), "single-pass F<=128 mismatch"

    # (b) F=500: several 128-wide lane-dense feature tiles with a ragged last
    #     tile, handled entirely in-kernel (no pad / output slice round-trip).
    T2, F2 = 64, 500
    x2 = jax.random.normal(k2, (T2, F2), dtype=jnp.float32) * 2.0 - 0.7
    out2 = jax.block_until_ready(cmvn(x2))
    ref2 = cmvn_ref(x2)
    assert out2.shape == x2.shape and out2.dtype == x2.dtype
    assert jnp.allclose(out2, ref2, atol=1e-5, rtol=1e-5), "single-pass ragged-F mismatch"

    # (c) Forced two-pass with a small T tile: ragged T/F tiles are masked
    #     in-kernel; on 2-TC chips the T reduction is core-split and combined.
    T3, F3 = 300, 80
    x3 = jax.random.normal(k3, (T3, F3), dtype=jnp.float32) * 3.0 + 100.0
    out3 = jax.block_until_ready(cmvn(x3, two_pass=True, t_tile=128))
    ref3 = cmvn_ref(x3)
    assert out3.shape == x3.shape and out3.dtype == x3.dtype
    # Shifted accumulation keeps this tight even with a mean of ~100.
    assert jnp.allclose(out3, ref3, atol=1e-4, rtol=1e-4), "two-pass mismatch"

    # (d) bf16 input through the two-pass path (T tile rounds to the bf16
    #     sublane packing of 16).
    T4, F4 = 300, 80
    x4f = jax.random.normal(k4, (T4, F4), dtype=jnp.float32) * 2.0 + 0.5
    x4 = x4f.astype(jnp.bfloat16)
    out4 = jax.block_until_ready(cmvn(x4, two_pass=True, t_tile=100))
    ref4 = cmvn_ref(x4.astype(jnp.float32))
    assert out4.shape == x4.shape and out4.dtype == x4.dtype
    assert jnp.allclose(out4.astype(jnp.float32), ref4, atol=5e-2, rtol=5e-2), \
        "two-pass bf16 mismatch"

    print("KERNEL_OK")
</pallas_src>

<mosaic_0001>
module attributes {stable_mosaic.version = 11 : i64} {
  func.func @_cmvn_kernel(%arg0: i32, %arg1: memref<16x80xf32, #tpu.memory_space<vmem>>, %arg2: memref<16x80xf32, #tpu.memory_space<vmem>>) attributes {dimension_semantics = [#tpu.dimension_semantics<parallel>], iteration_bounds = array<i64: 1>, scalar_prefetch = 0 : i64, scratch_operands = 0 : i64, tpu.core_type = #tpu.core_type<tc>, window_params = [{transform_indices = @transform_0, window_bounds = array<i64: 16, 80>}, {transform_indices = @transform_1, window_bounds = array<i64: 16, 80>}]} {
    %c0 = arith.constant 0 : index
    %c0_0 = arith.constant 0 : index
    %0 = vector.load %arg1[%c0, %c0_0] : memref<16x80xf32, #tpu.memory_space<vmem>>, vector<16x80xf32>
    %cst = arith.constant dense<0.000000e+00> : vector<80xf32>
    %1 = vector.multi_reduction <add>, %0, %cst [0] : vector<16x80xf32> to vector<80xf32>
    %2 = vector.shape_cast %1 : vector<80xf32> to vector<1x80xf32>
    %cst_1 = arith.constant 1.600000e+01 : f32
    %3 = vector.broadcast %cst_1 : f32 to vector<1x80xf32>
    %4 = arith.divf %2, %3 : vector<1x80xf32>
    %5 = vector.broadcast %4 : vector<1x80xf32> to vector<16x80xf32>
    %6 = arith.subf %0, %5 : vector<16x80xf32>
    %7 = arith.mulf %6, %6 : vector<16x80xf32>
    %cst_2 = arith.constant dense<0.000000e+00> : vector<80xf32>
    %8 = vector.multi_reduction <add>, %7, %cst_2 [0] : vector<16x80xf32> to vector<80xf32>
    %9 = vector.shape_cast %8 : vector<80xf32> to vector<1x80xf32>
    %cst_3 = arith.constant 0.0666666701 : f32
    %10 = vector.broadcast %cst_3 : f32 to vector<1x80xf32>
    %11 = arith.mulf %9, %10 : vector<1x80xf32>
    %12 = math.sqrt %11 : vector<1x80xf32>
    %cst_4 = arith.constant 1.000000e-10 : f32
    %13 = vector.broadcast %cst_4 : f32 to vector<1x80xf32>
    %14 = arith.addf %13, %12 : vector<1x80xf32>
    %cst_5 = arith.constant 1.000000e+00 : f32
    %15 = vector.broadcast %cst_5 : f32 to vector<1x80xf32>
    %16 = arith.divf %15, %14 : vector<1x80xf32>
    %17 = vector.broadcast %16 : vector<1x80xf32> to vector<16x80xf32>
    %18 = arith.mulf %6, %17 : vector<16x80xf32>
    %c0_6 = arith.constant 0 : index
    %c0_7 = arith.constant 0 : index
    %19 = vector.load %arg2[%c0_6, %c0_7] : memref<16x80xf32, #tpu.memory_space<vmem>>, vector<16x80xf32>
    tpu.vector_store %arg2[%c0_6, %c0_7], %18 {strides = array<i32>} : memref<16x80xf32, #tpu.memory_space<vmem>>, vector<16x80xf32>,
    return
  }
  func.func @transform_0(%arg0: i32) -> (i32, i32) {
    %c0_i32 = arith.constant 0 : i32
    %c0_i32_0 = arith.constant 0 : i32
    return %c0_i32, %arg0 : i32, i32
  }
  func.func @transform_1(%arg0: i32) -> (i32, i32) {
    %c0_i32 = arith.constant 0 : i32
    %c0_i32_0 = arith.constant 0 : i32
    return %c0_i32, %arg0 : i32, i32
  }
}

</mosaic_0001>

<llo_original>
// kernel: tpu_custom_call.1
$region0: #{tpu_custom_call.1}
  #allocation0 [shape = 'u32[]', space=smem, size = 0x4, offset = 0x4, fixed_abs, tag = 'smem constant byte address 0x4 - core index']
  #allocation1 [shape = 'u32[144,128]{1,0:T(1,128)}', space=vmem, size = 0x12000, scoped, tag = 'internal scratch']
  %s0 = inlined_call_operand.hbm [shape: f32[16,80], index: 0, kind: input, shape index: {}]
  %s1 = inlined_call_operand.hbm [shape: f32[16,80], index: 1, kind: output, shape index: {}]
  %s2 = sld [smem:[#allocation0]]
  $region18: #{tpu_custom_call.1} parent=0
    _
  %s4 = ssub.s32 1, %s2
  %s5 = scalar_select 0, %s4, %s2
  $region1: #{tpu_custom_call.1} parent=0
    #allocation2 [shape = 'u8[8192]{0}', space=vmem, size = 0x2000, scoped, tag = 'input window, operand 0, single buffered']
    #allocation3 [shape = 's32[1]{0}', space=sflag, size = 0x4, scoped, tag = 'scoped memory for tpu_custom_call.1']
    #allocation4 [shape = 's32[1]{0}', space=sflag, size = 0x4, scoped, tag = 'scoped memory for tpu_custom_call.1']
    #allocation5 [shape = 'u8[8192]{0}', space=vmem, size = 0x2000, scoped, tag = 'output window, operand 0, single buffered']
    %6 = vsyncpa [#allocation3], 0
    %7 = vsyncpa [#allocation4], 0
    // Predicated region
    $region2: #{tpu_custom_call.1} parent=1 // pred_check
      _
    $region3: #{tpu_custom_call.1} parent=1 // pred_check_branch
      %9 = sbr.rel (0) target = $region5
    $region4: #{tpu_custom_call.1} parent=1 // pred_region
      %s11 = ssub.s32 256, 256
      %12 = vsyncadd [#allocation3], %s11
      %s13 = sshll.u32 [#allocation2], 4
      %s14 = int_to_ptr.vmem [resolvable:$true] %s13
      %19 = dma.hbm_to_vmem [thread:$0]  %s0, 256, %s14, [#allocation3], 128, 128, 8
    $region5: #{tpu_custom_call.1} parent=1 // pred_fallthru
      _
    // Predicated region
    $region6: #{tpu_custom_call.1} parent=1 // pred_check
      _
    $region7: #{tpu_custom_call.1} parent=1 // pred_check_branch
      %21 = sbr.rel (0) target = $region9
    $region8: #{tpu_custom_call.1} parent=1 // pred_region
      %22 = dma.done [#allocation3], 256
    $region9: #{tpu_custom_call.1} parent=1 // pred_fallthru
      _
    %v23 = vld [vmem:[#allocation2] sm:$0xff]
    %v24 = vld [vmem:[#allocation2 + $0x8] sm:$0xff]
    %vm25 = vcmask 654336
    %v26 = vsel %vm25, %v23, 0.0
    %v27 = vsel %vm25, %v24, 0.0
    %v28 = vadd.f32 %v26, %v27
    %v29 = vrot.slane %v28, 4
    %v30 = vadd.f32 %v28, %v29
    %v31 = vrot.slane %v30, 2
    %v32 = vadd.f32 %v30, %v31
    %v33 = vrot.slane %v32, 1
    %v34 = vadd.f32 %v32, %v33
    %v35 = vrcp.pop 16.0
    %v36 = vmul.f32 %v34, %v35
    %v37 = vsub.f32 %v23, %v36
    %v38 = vsub.f32 %v24, %v36
    %v39 = vmul.f32 %v37, %v37
    %v40 = vmul.f32 %v38, %v38
    %v41 = vsel %vm25, %v39, 0.0
    %v42 = vsel %vm25, %v40, 0.0
    %v43 = vadd.f32 %v41, %v42
    %v44 = vrot.slane %v43, 4
    %v45 = vadd.f32 %v43, %v44
    %v46 = vrot.slane %v45, 2
    %v47 = vadd.f32 %v45, %v46
    %v48 = vrot.slane %v47, 1
    %v49 = vadd.f32 %v47, %v48
    %v50 = vmul.f32 %v49, 0.06666667
    %v51 = vrsqrt.pop %v50
    %v52 = vmul.f32 %v50, %v51
    %vm53 = vcmp.eq.f32.partialorder %v50, inf
    %v54 = vsel %vm53, %v50, %v52
    %vm55 = vcmp.eq.f32.partialorder %v50, 0.0
    %v56 = vand.u32 %v50, 2147483648
    %v57 = vsel %vm55, %v56, %v54
    %v58 = vadd.f32 %v57, 1e-10
    %v59 = vrcp.pop %v58
    %v60 = vmul.f32 1.0, %v59
    %v61 = vmul.f32 %v37, %v60
    %v62 = vmul.f32 %v38, %v60
    %63 = vst.msk [vmem:[#allocation5] sm:$0xff] %vm25, %v61
    %64 = vst.msk [vmem:[#allocation5 + $0x8] sm:$0xff] %vm25, %v62
    // Predicated region
    $region10: #{tpu_custom_call.1} parent=1 // pred_check
      _
    $region11: #{tpu_custom_call.1} parent=1 // pred_check_branch
      %66 = sbr.rel (0) target = $region13
    $region12: #{tpu_custom_call.1} parent=1 // pred_region
      %s68 = ssub.s32 256, 256
      %69 = vsyncadd [#allocation4], %s68
      %s70 = sshll.u32 [#allocation5], 4
      %s71 = int_to_ptr.vmem [resolvable:$true] %s70
      %76 = dma.vmem_to_hbm [thread:$0]  %s71, 256, %s1, [#allocation4], 128, 128, 8
    $region13: #{tpu_custom_call.1} parent=1 // pred_fallthru
      _
    // Predicated region
    $region14: #{tpu_custom_call.1} parent=1 // pred_check
      _
    $region15: #{tpu_custom_call.1} parent=1 // pred_check_branch
      %78 = sbr.rel (0) target = $region17
    $region16: #{tpu_custom_call.1} parent=1 // pred_region
      %79 = dma.done [#allocation4], 256
    $region17: #{tpu_custom_call.1} parent=1 // pred_fallthru
      _
    %80 = vsyncpa [#allocation3], 1
    %81 = vsyncpa [#allocation4], 1

</llo_original>
